<compile_context>
chip_gen: v6e
topology: v6e:2x2x1
jax: 0.10.0
libtpu: 0.0.40
codegen_flags: <defaults>
</compile_context>

<pallas_src>
import jax
import jax.numpy as jnp
from jax.experimental import pallas as pl
from jax.experimental.pallas import tpu as pltpu


def attention_head_kernel(feat_ref, w_ref, bw_ref, v_ref, out_ref):
    # feat_ref : (Bt*S, H) f32  -- features for Bt batch elements, flattened
    # w_ref    : (H, D)   bf16  -- W.weight^T (pre-cast in wrapper)
    # bw_ref   : (1, D)   f32   -- W.bias
    # v_ref    : (1, D)   f32   -- V.weight as a row
    # out_ref  : (Bt, H)  f32
    bt = out_ref.shape[0]
    seq = feat_ref.shape[0] // bt
    h = feat_ref.shape[-1]

    feat = feat_ref[...]                                          # (Bt*S, H)

    # MXU matmul in bf16 with f32 accumulation: (Bt*S, H) @ (H, D) -> (Bt*S, D)
    att = jnp.tanh(
        jnp.dot(feat.astype(jnp.bfloat16), w_ref[...],
                preferred_element_type=jnp.float32)
        + bw_ref[...]
    )
    # TODO(synk): on v6e/v7x the tanh could run in bf16 (2x EUP throughput,
    # half the intermediate VMEM); kept f32 so the same kernel is right for v5e.

    # score = att @ V^T on the VPU (an N=1 MXU matmul would waste the unit).
    # V.bias cancels exactly under the softmax, so it is omitted.
    score = jnp.sum(att * v_ref[...], axis=-1, keepdims=True)     # (Bt*S, 1)
    score = score.reshape(bt, seq)                                # lane-dense

    # softmax over the sequence (lane) axis, per batch element
    m = jnp.max(score, axis=-1, keepdims=True)                    # (Bt, 1)
    e = jnp.exp(score - m)                                        # (Bt, S)
    attn = e / jnp.sum(e, axis=-1, keepdims=True)                 # exact divide

    # context[b, h] = sum_s attn[b, s] * feat[b, s, h]
    weighted = attn.reshape(bt * seq, 1) * feat                   # (Bt*S, H)
    ctx = jnp.sum(weighted.reshape(bt, seq, h), axis=1)           # (Bt, H)
    out_ref[...] = ctx.astype(out_ref.dtype)


def _legal_block_b(B, S, target):
    """Largest divisor of B that is <= target and keeps the flattened
    (d*S, H) block sublane-tileable; falls back to the full batch."""
    best = None
    for d in range(1, B + 1):
        if B % d == 0 and d <= target and (d == B or (d * S) % 8 == 0):
            best = d
    return best if best is not None else B


def _pick_block_b(B, S, H, itemsize=4):
    """VMEM-budget + pipelining-aware batch tile."""
    bytes_per_b = S * H * itemsize
    total = B * bytes_per_b
    if B == 1 or total <= (1 << 20):
        return B                                   # tiny input: single step
    target = max(1, (2 << 20) // bytes_per_b)      # ~2 MiB of features / step
    if B >= 4:
        target = min(target, max(1, B // 4))       # >= 4 pipelined steps
    return _legal_block_b(B, S, target)
    # TODO(synk): for huge S*H per row (won't fit v7x's 64 MiB VMEM) a
    # flash-style sequence-tiled grid axis with online softmax is needed.


def attention_head(features, w, bw, v, bv=None, *, block_b=None, interpret=False):
    """features: (B, S, H) f32 -> context vector (B, H) f32.

    `bv` is accepted for API parity with the PyTorch module but unused:
    a scalar bias on every score cancels exactly under softmax.
    """
    del bv
    B, S, H = features.shape
    D = w.shape[1]
    itemsize = features.dtype.itemsize

    if block_b is None:
        block_b = _pick_block_b(B, S, H, itemsize)
    else:
        block_b = _legal_block_b(B, S, max(1, min(int(block_b), B)))
    grid_b = B // block_b

    # Wrapper-side layout plumbing (free / cheap at XLA level):
    feat_flat = features.reshape(B * S, H)         # contiguous -> no copy
    w_bf16 = w.astype(jnp.bfloat16)                # MXU-native, half the DMA
    bw2 = bw.reshape(1, D).astype(jnp.float32)
    v2 = v.reshape(1, D).astype(jnp.float32)

    # Explicit scoped-VMEM budget from the actual block sizes (+~33% headroom).
    feat_blk = block_b * S * H * itemsize
    out_blk = block_b * H * itemsize
    att_blk = block_b * S * D * 4                  # f32 intermediate
    param_bytes = H * D * 2 + 2 * D * 4            # bf16 W + f32 bW, V rows
    needed = (2 * feat_blk                         # double-buffered features
              + 2 * out_blk                        # double-buffered output
              + 2 * param_bytes                    # invariant weights (2 bufs)
              + 2 * att_blk                        # att + weighted temporaries
              + (1 << 20))                         # internal scratch slack
    vmem_limit = int(min(56 << 20, max(needed * 4 // 3, 16 << 20)))

    return pl.pallas_call(
        attention_head_kernel,
        out_shape=jax.ShapeDtypeStruct((B, H), features.dtype),
        grid_spec=pltpu.PrefetchScalarGridSpec(
            num_scalar_prefetch=0,
            grid=(grid_b,),
            in_specs=[
                pl.BlockSpec((block_b * S, H), lambda b: (b, 0)),  # features
                pl.BlockSpec((H, D), lambda b: (0, 0)),            # W (bf16)
                pl.BlockSpec((1, D), lambda b: (0, 0)),            # bW
                pl.BlockSpec((1, D), lambda b: (0, 0)),            # V row
            ],
            out_specs=pl.BlockSpec((block_b, H), lambda b: (b, 0)),
        ),
        compiler_params=pltpu.CompilerParams(
            dimension_semantics=("parallel",),
            vmem_limit_bytes=vmem_limit,
        ),
        interpret=interpret,
    )(feat_flat, w_bf16, bw2, v2)


def attention_head_ref(features, w, bw, v, bv):
    """Pure-JAX reference mirroring the PyTorch forward exactly."""
    att = jnp.tanh(features @ w + bw)              # (B, S, D)
    score = att @ v.reshape(-1, 1) + bv            # (B, S, 1)
    attn = jax.nn.softmax(score, axis=1)           # softmax over seq
    return jnp.sum(attn * features, axis=1)        # (B, H)


if __name__ == "__main__":
    # Small shapes consistent with the module: (batch, seq, h_size), hidden_dim
    B, S, H, D = 2, 8, 32, 64

    key = jax.random.PRNGKey(0)
    k_feat, k_w, k_bw, k_v, k_bv = jax.random.split(key, 5)

    features = jax.random.normal(k_feat, (B, S, H), dtype=jnp.float32)
    # nn.Linear shapes: W.weight (D, H) -> stored here as W.weight^T (H, D)
    w = jax.random.normal(k_w, (H, D), dtype=jnp.float32) * 0.1
    bw = jax.random.normal(k_bw, (D,), dtype=jnp.float32) * 0.1
    v = jax.random.normal(k_v, (D,), dtype=jnp.float32) * 0.1     # V.weight^T
    bv = jax.random.normal(k_bv, (1,), dtype=jnp.float32) * 0.1   # V.bias

    ref = attention_head_ref(features, w, bw, v, bv)

    # 1) Auto block choice (tiny input -> single grid step, whole-array blocks)
    out = jax.block_until_ready(attention_head(features, w, bw, v, bv))
    assert out.shape == (B, H)
    # bf16 MXU inputs -> relaxed (but still tight) tolerance vs f32 reference
    assert jnp.allclose(out, ref, atol=2e-2, rtol=2e-2), "mismatch (auto block)"

    # 2) Force the tiled / pipelined path (grid_b == 2)
    out_t = jax.block_until_ready(
        attention_head(features, w, bw, v, bv, block_b=1))
    assert jnp.allclose(out_t, ref, atol=2e-2, rtol=2e-2), "mismatch (tiled)"

    print("KERNEL_OK")
</pallas_src>

<mosaic_0001>
module attributes {stable_mosaic.version = 11 : i64} {
  func.func @attention_head_kernel(%arg0: i32, %arg1: memref<16x32xf32, #tpu.memory_space<vmem>>, %arg2: memref<32x64xbf16, #tpu.memory_space<vmem>>, %arg3: memref<1x64xf32, #tpu.memory_space<vmem>>, %arg4: memref<1x64xf32, #tpu.memory_space<vmem>>, %arg5: memref<2x32xf32, #tpu.memory_space<vmem>>) attributes {dimension_semantics = [#tpu.dimension_semantics<parallel>], iteration_bounds = array<i64: 1>, scalar_prefetch = 0 : i64, scratch_operands = 0 : i64, tpu.core_type = #tpu.core_type<tc>, window_params = [{transform_indices = @transform_0, window_bounds = array<i64: 16, 32>}, {pipeline_mode = #tpu.pipeline_mode<synchronous>, transform_indices = @transform_1, window_bounds = array<i64: 32, 64>}, {pipeline_mode = #tpu.pipeline_mode<synchronous>, transform_indices = @transform_2, window_bounds = array<i64: 1, 64>}, {pipeline_mode = #tpu.pipeline_mode<synchronous>, transform_indices = @transform_3, window_bounds = array<i64: 1, 64>}, {transform_indices = @transform_4, window_bounds = array<i64: 2, 32>}]} {
    %c0 = arith.constant 0 : index
    %c0_0 = arith.constant 0 : index
    %0 = vector.load %arg1[%c0, %c0_0] : memref<16x32xf32, #tpu.memory_space<vmem>>, vector<16x32xf32>
    %1 = arith.truncf %0 : vector<16x32xf32> to vector<16x32xbf16>
    %c0_1 = arith.constant 0 : index
    %c0_2 = arith.constant 0 : index
    %2 = vector.load %arg2[%c0_1, %c0_2] : memref<32x64xbf16, #tpu.memory_space<vmem>>, vector<32x64xbf16>
    %cst = arith.constant dense<0.000000e+00> : vector<16x64xf32>
    %3 = tpu.matmul %1, %2, %cst {dimension_numbers = #tpu.dot_dimension_numbers<[1], [0], [0], [1], [0, 0, 1, 1], [], []>} : vector<16x32xbf16>, vector<32x64xbf16>, vector<16x64xf32> -> vector<16x64xf32>
    %c0_3 = arith.constant 0 : index
    %c0_4 = arith.constant 0 : index
    %4 = vector.load %arg3[%c0_3, %c0_4] : memref<1x64xf32, #tpu.memory_space<vmem>>, vector<1x64xf32>
    %5 = vector.broadcast %4 : vector<1x64xf32> to vector<16x64xf32>
    %6 = arith.addf %3, %5 : vector<16x64xf32>
    %7 = math.tanh %6 : vector<16x64xf32>
    %c0_5 = arith.constant 0 : index
    %c0_6 = arith.constant 0 : index
    %8 = vector.load %arg4[%c0_5, %c0_6] : memref<1x64xf32, #tpu.memory_space<vmem>>, vector<1x64xf32>
    %9 = vector.broadcast %8 : vector<1x64xf32> to vector<16x64xf32>
    %10 = arith.mulf %7, %9 : vector<16x64xf32>
    %cst_7 = arith.constant dense<0.000000e+00> : vector<16xf32>
    %11 = vector.multi_reduction <add>, %10, %cst_7 [1] : vector<16x64xf32> to vector<16xf32>
    %12 = vector.shape_cast %11 : vector<16xf32> to vector<16x1xf32>
    %13 = vector.shape_cast %12 : vector<16x1xf32> to vector<2x8xf32>
    %cst_8 = arith.constant dense<0xFF800000> : vector<2xf32>
    %14 = vector.multi_reduction <maximumf>, %13, %cst_8 [1] : vector<2x8xf32> to vector<2xf32>
    %15 = vector.shape_cast %14 : vector<2xf32> to vector<2x1xf32>
    %16 = vector.broadcast %15 : vector<2x1xf32> to vector<2x8xf32>
    %17 = arith.subf %13, %16 : vector<2x8xf32>
    %18 = math.exp %17 : vector<2x8xf32>
    %cst_9 = arith.constant dense<0.000000e+00> : vector<2xf32>
    %19 = vector.multi_reduction <add>, %18, %cst_9 [1] : vector<2x8xf32> to vector<2xf32>
    %20 = vector.shape_cast %19 : vector<2xf32> to vector<2x1xf32>
    %21 = vector.broadcast %20 : vector<2x1xf32> to vector<2x8xf32>
    %22 = arith.divf %18, %21 : vector<2x8xf32>
    %23 = vector.shape_cast %22 : vector<2x8xf32> to vector<16x1xf32>
    %24 = vector.broadcast %23 : vector<16x1xf32> to vector<16x32xf32>
    %25 = arith.mulf %24, %0 : vector<16x32xf32>
    %26 = vector.shape_cast %25 : vector<16x32xf32> to vector<2x8x32xf32>
    %cst_10 = arith.constant dense<0.000000e+00> : vector<2x32xf32>
    %27 = vector.multi_reduction <add>, %26, %cst_10 [1] : vector<2x8x32xf32> to vector<2x32xf32>
    %c0_11 = arith.constant 0 : index
    %c0_12 = arith.constant 0 : index
    %28 = vector.load %arg5[%c0_11, %c0_12] : memref<2x32xf32, #tpu.memory_space<vmem>>, vector<2x32xf32>
    tpu.vector_store %arg5[%c0_11, %c0_12], %27 {strides = array<i32>} : memref<2x32xf32, #tpu.memory_space<vmem>>, vector<2x32xf32>,
    return
  }
  func.func @transform_0(%arg0: i32) -> (i32, i32) {
    %c0_i32 = arith.constant 0 : i32
    %c0_i32_0 = arith.constant 0 : i32
    return %arg0, %c0_i32 : i32, i32
  }
  func.func @transform_1(%arg0: i32) -> (i32, i32) {
    %c0_i32 = arith.constant 0 : i32
    %c0_i32_0 = arith.constant 0 : i32
    %c0_i32_1 = arith.constant 0 : i32
    return %c0_i32, %c0_i32_0 : i32, i32
  }
  func.func @transform_2(%arg0: i32) -> (i32, i32) {
    %c0_i32 = arith.constant 0 : i32
    %c0_i32_0 = arith.constant 0 : i32
    %c0_i32_1 = arith.constant 0 : i32
    return %c0_i32, %c0_i32_0 : i32, i32
  }
  func.func @transform_3(%arg0: i32) -> (i32, i32) {
    %c0_i32 = arith.constant 0 : i32
    %c0_i32_0 = arith.constant 0 : i32
    %c0_i32_1 = arith.constant 0 : i32
    return %c0_i32, %c0_i32_0 : i32, i32
  }
  func.func @transform_4(%arg0: i32) -> (i32, i32) {
    %c0_i32 = arith.constant 0 : i32
    %c0_i32_0 = arith.constant 0 : i32
    return %arg0, %c0_i32 : i32, i32
  }
}

</mosaic_0001>

<llo_original>
// kernel: tpu_custom_call.1
$region0: #{tpu_custom_call.1}
  #allocation0 [shape = 'u32[]', space=smem, size = 0x4, offset = 0x4, fixed_abs, tag = 'smem constant byte address 0x4 - core index']
  #allocation1 [shape = 'u32[144,128]{1,0:T(1,128)}', space=vmem, size = 0x12000, scoped, tag = 'internal scratch']
  %s0 = inlined_call_operand.hbm [shape: f32[16,32], index: 0, kind: input, shape index: {}]
  %s1 = inlined_call_operand.hbm [shape: bf16[32,64], index: 1, kind: input, shape index: {}]
  %s2 = inlined_call_operand.vmem [shape: f32[1,64], index: 2, kind: input, shape index: {}]
  %s3 = inlined_call_operand.vmem [shape: f32[1,64], index: 3, kind: input, shape index: {}]
  %s4 = inlined_call_operand.hbm [shape: f32[2,32], index: 4, kind: output, shape index: {}]
  %s5 = sld [smem:[#allocation0]]
  $region34: #{tpu_custom_call.1} parent=0
    _
  %s7 = ssub.s32 1, %s5
  %s8 = scalar_select 0, %s7, %s5
  $region1: #{tpu_custom_call.1} parent=0
    #allocation2 [shape = 'u8[8192]{0}', space=vmem, size = 0x2000, scoped, tag = 'input window, operand 0, single buffered']
    #allocation3 [shape = 's32[1]{0}', space=sflag, size = 0x4, scoped, tag = 'scoped memory for tpu_custom_call.1']
    #allocation4 [shape = 's32[1]{0}', space=sflag, size = 0x4, scoped, tag = 'scoped memory for tpu_custom_call.1']
    #allocation5 [shape = 'u8[8192]{0}', space=vmem, size = 0x2000, scoped, tag = 'input window, operand 1, single buffered']
    #allocation6 [shape = 's32[1]{0}', space=sflag, size = 0x4, scoped, tag = 'scoped memory for tpu_custom_call.1']
    #allocation7 [shape = 'u8[1024]{0}', space=vmem, size = 0x400, scoped, tag = 'output window, operand 0, single buffered']
    %9 = vsyncpa [#allocation3], 0
    %10 = vsyncpa [#allocation6], 0
    %11 = vsyncpa [#allocation4], 0
    // Predicated region
    $region2: #{tpu_custom_call.1} parent=1 // pred_check
      _
    $region3: #{tpu_custom_call.1} parent=1 // pred_check_branch
      %13 = sbr.rel (0) target = $region5
    $region4: #{tpu_custom_call.1} parent=1 // pred_region
      %s15 = ssub.s32 256, 256
      %16 = vsyncadd [#allocation3], %s15
      %s17 = sshll.u32 [#allocation2], 4
      %s18 = int_to_ptr.vmem [resolvable:$true] %s17
      %23 = dma.hbm_to_vmem [thread:$0]  %s0, 256, %s18, [#allocation3], 128, 128, 8
    $region5: #{tpu_custom_call.1} parent=1 // pred_fallthru
      _
    // Predicated region
    $region6: #{tpu_custom_call.1} parent=1 // pred_check
      _
    $region7: #{tpu_custom_call.1} parent=1 // pred_check_branch
      %25 = sbr.rel (0) target = $region9
    $region8: #{tpu_custom_call.1} parent=1 // pred_region
      %s27 = ssub.s32 256, 256
      %28 = vsyncadd [#allocation6], %s27
      %s29 = sshll.u32 [#allocation5], 4
      %s30 = int_to_ptr.vmem [resolvable:$true] %s29
      %35 = dma.hbm_to_vmem [thread:$0]  %s1, 256, %s30, [#allocation6], 64, 64, 4
    $region9: #{tpu_custom_call.1} parent=1 // pred_fallthru
      _
    // Predicated region
    $region10: #{tpu_custom_call.1} parent=1 // pred_check
      _
    $region11: #{tpu_custom_call.1} parent=1 // pred_check_branch
      %37 = sbr.rel (0) target = $region13
    $region12: #{tpu_custom_call.1} parent=1 // pred_region
      _
    $region13: #{tpu_custom_call.1} parent=1 // pred_fallthru
      _
    // Predicated region
    $region14: #{tpu_custom_call.1} parent=1 // pred_check
      _
    $region15: #{tpu_custom_call.1} parent=1 // pred_check_branch
      %39 = sbr.rel (0) target = $region17
    $region16: #{tpu_custom_call.1} parent=1 // pred_region
      _
    $region17: #{tpu_custom_call.1} parent=1 // pred_fallthru
      _
    // Predicated region
    $region18: #{tpu_custom_call.1} parent=1 // pred_check
      _
    $region19: #{tpu_custom_call.1} parent=1 // pred_check_branch
      %41 = sbr.rel (0) target = $region21
    $region20: #{tpu_custom_call.1} parent=1 // pred_region
      %42 = dma.done [#allocation3], 256
    $region21: #{tpu_custom_call.1} parent=1 // pred_fallthru
      _
    // Predicated region
    $region22: #{tpu_custom_call.1} parent=1 // pred_check
      _
    $region23: #{tpu_custom_call.1} parent=1 // pred_check_branch
      %44 = sbr.rel (0) target = $region25
    $region24: #{tpu_custom_call.1} parent=1 // pred_region
      %45 = dma.done [#allocation6], 256
    $region25: #{tpu_custom_call.1} parent=1 // pred_fallthru
      _
    %v47 = vld [vmem:[#allocation2] sm:$0xff]
    %v48 = vld [vmem:[#allocation2 + $0x8] sm:$0xff]
    %v49 = vpack.c.bf16 %v48, %v47
    %v50 = vld [vmem:[#allocation5] sm:$0xf]
    %v51 = vld [vmem:[#allocation5 + $0x4] sm:$0xf]
    %v52 = vld [vmem:[#allocation5 + $0x8] sm:$0xf]
    %v53 = vld [vmem:[#allocation5 + $0xc] sm:$0xf]
    %v54 = vld [vmem:[%s2] sm:$0x1]
    %v56 = vlaneseq
    %v57 = vshrl.u32 %v56, 7
    %v58 = vsub.s32 0, %v57
    %v59 = vrot.slane %v54, %v58
    %v65 = vunpack.c.l.b16 %v50
    %v66 = vunpack.c.l.b16 %v51
    %v67 = vunpack.c.l.b16 %v52
    %v68 = vunpack.c.l.b16 %v53
    %v69 = vpack.c.b16 %v66, %v65
    %v70 = vpack.c.b16 %v68, %v67
    %vm73 = vcmask 261120
    %v75 = vsel %vm73, %v49, 0
    %77 = vmatprep.subr.bf16.mxu0 0
    %78 = vmatpush1.bf16.msra.mxu0 0
    %79 = vmatprep.subr.bf16.mxu0 0
    %80 = vmatpush1.bf16.msra.mxu0 0
    %81 = vmatprep.subr.bf16.mxu0 0
    %82 = vmatpush1.bf16.msra.mxu0 0
    %83 = vmatprep.subr.bf16.mxu0 0
    %84 = vmatpush1.bf16.msra.mxu0 0
    %85 = vmatprep.subr.bf16.mxu0 0
    %86 = vmatpush1.bf16.msra.mxu0 0
    %87 = vmatprep.subr.bf16.mxu0 0
    %88 = vmatpush1.bf16.msra.mxu0 0
    %89 = vmatprep.subr.bf16.mxu0 0
    %90 = vmatpush1.bf16.msra.mxu0 %v70
    %91 = vmatprep.subr.bf16.mxu0 0
    %92 = vmatpush1.bf16.msra.mxu0 %v69
    %93 = vmatprep.subr.bf16.mxu0 0
    %94 = vmatpush2.bf16.msra.mxu0 0
    %95 = vmatprep.subr.bf16.mxu0 0
    %96 = vmatpush2.bf16.msra.mxu0 0
    %97 = vmatprep.subr.bf16.mxu0 0
    %98 = vmatpush2.bf16.msra.mxu0 0
    %99 = vmatprep.subr.bf16.mxu0 0
    %100 = vmatpush2.bf16.msra.mxu0 0
    %101 = vmatprep.subr.bf16.mxu0 0
    %102 = vmatpush2.bf16.msra.mxu0 0
    %103 = vmatprep.subr.bf16.mxu0 0
    %104 = vmatpush2.bf16.msra.mxu0 0
    %105 = vmatprep.subr.bf16.mxu0 0
    %106 = vmatpush2.bf16.msra.mxu0 0
    %107 = vmatprep.subr.bf16.mxu0 0
    %108 = vmatpush2.bf16.msra.mxu0 0
    %109 = vmatprep.mubr.bf16.mxu0 0
    %110 = vmatmul.mubr.bf16.gmra.mxu0 %v75
    %v111 = vpop.f32.mrf.mxu0
    %v112 = vadd.f32 %v59, %v111
    %v113 = vpop.f32.mrf.mxu0
    %v114 = vpop.f32.mrf.mxu0
    %v115 = vadd.f32 %v59, %v114
    %v116 = vpop.f32.mrf.mxu0
    %117 = vdwg.mxu0
    %v118 = vtanh.pop %v112
    %v119 = vtanh.pop %v115
    %v120 = vld [vmem:[%s3] sm:$0x1]
    %v122 = vlaneseq
    %v123 = vshrl.u32 %v122, 7
    %v124 = vsub.s32 0, %v123
    %v125 = vrot.slane %v120, %v124
    %v127 = vmul.f32 %v118, %v125
    %v128 = vmul.f32 %v119, %v125
    %vm129 = vcmask 523264
    %v130 = vsel %vm129, %v127, 0.0
    %131 = vadd.xlane.f32.xlu0 %v130
    %v132 = vpop.xlane.xlu0 %131
    %v133 = vsel %vm129, %v128, 0.0
    %134 = vadd.xlane.f32.xlu0 %v133
    %v135 = vpop.xlane.xlu0 %134
    %v138 = vlaneseq
    %v139 = vand.u32 %v138, 127
    %v140 = vlaneseq
    %v141 = vshrl.u32 %v140, 7
    %v142 = vsub.s32 %v139, %v141
    %v143 = vrot.slane %v132, %v142
    %v144 = vlaneseq
    %v145 = vshrl.u32 %v144, 7
    %v146 = vsub.s32 %v139, %v145
    %v147 = vrot.slane %v135, %v146
    %vm148 = vcmask 1041409
    %v149 = vsel %vm148, %v147, %v143
    %vm151 = vcmask 58368
    %v152 = vsel %vm151, %v149, -inf
    %153 = vmax.xlane.f32.xlu0 %v152
    %v154 = vpop.xlane.xlu0 %153
    %v156 = vlaneseq
    %v157 = vshrl.u32 %v156, 7
    %v158 = vsub.s32 0, %v157
    %v159 = vrot.slane %v154, %v158
    %v160 = vlaneseq
    %v161 = vshrl.u32 %v160, 7
    %v162 = vsub.s32 1, %v161
    %v163 = vrot.slane %v154, %v162
    %v166 = vsub.f32 %v132, %v159
    %v167 = vsub.f32 %v135, %v163
    %v168 = vmul.f32 %v166, 1.442695
    %v169 = vpow.pop %v168
    %v170 = vmul.f32 %v167, 1.442695
    %v171 = vpow.pop %v170
    %174 = vset.pattern.permute.xlu0 0
    %175 = vperm.xlu0 %174, %v169
    %v176 = vpop.permute.xlu0 %175
    %177 = vset.pattern.permute.xlu0 0
    %178 = vperm.xlu0 %177, %v171
    %v179 = vpop.permute.xlu0 %178
    %v180 = vlaneseq
    %v181 = vshrl.u32 %v180, 7
    %v182 = vsub.s32 %v139, %v181
    %v183 = vrot.slane %v176, %v182
    %v184 = vlaneseq
    %v185 = vshrl.u32 %v184, 7
    %v186 = vsub.s32 %v139, %v185
    %v187 = vrot.slane %v179, %v186
    %v188 = vsel %vm148, %v187, %v183
    %v190 = vsel %vm151, %v188, 0.0
    %191 = vadd.xlane.f32.xlu0 %v190
    %v192 = vpop.xlane.xlu0 %191
    %v194 = vlaneseq
    %v195 = vshrl.u32 %v194, 7
    %v196 = vsub.s32 0, %v195
    %v197 = vrot.slane %v192, %v196
    %v198 = vlaneseq
    %v199 = vshrl.u32 %v198, 7
    %v200 = vsub.s32 1, %v199
    %v201 = vrot.slane %v192, %v200
    %v204 = vrcp.pop %v197
    %v205 = vmul.f32 %v169, %v204
    %v206 = vrcp.pop %v201
    %v207 = vmul.f32 %v171, %v206
    %209 = vset.pattern.permute.xlu0 0
    %210 = vperm.xlu0 %209, %v205
    %v211 = vpop.permute.xlu0 %210
    %214 = vset.pattern.permute.xlu0 0
    %215 = vperm.xlu0 %214, %v207
    %v216 = vpop.permute.xlu0 %215
    %v218 = vmul.f32 %v211, %v47
    %v219 = vmul.f32 %v216, %v48
    %v220 = vsel %vm73, %v218, 0.0
    %v221 = vrot.slane %v220, 4
    %v222 = vadd.f32 %v220, %v221
    %v223 = vrot.slane %v222, 2
    %v224 = vadd.f32 %v222, %v223
    %v225 = vrot.slane %v224, 1
    %v226 = vadd.f32 %v224, %v225
    %v227 = vsel %vm73, %v219, 0.0
    %v228 = vrot.slane %v227, 4
    %v229 = vadd.f32 %v227, %v228
    %v230 = vrot.slane %v229, 2
    %v231 = vadd.f32 %v229, %v230
    %v232 = vrot.slane %v231, 1
    %v233 = vadd.f32 %v231, %v232
    %v236 = vsel %vm148, %v233, %v226
    %vm238 = vcmask 254976
    %239 = vst.msk [vmem:[#allocation7] sm:$0x3] %vm238, %v236
    // Predicated region
    $region26: #{tpu_custom_call.1} parent=1 // pred_check
      _
    $region27: #{tpu_custom_call.1} parent=1 // pred_check_branch
      %241 = sbr.rel (0) target = $region29
    $region28: #{tpu_custom_call.1} parent=1 // pred_region
      %s243 = ssub.s32 32, 32
      %244 = vsyncadd [#allocation4], %s243
      %s246 = sshll.u32 [#allocation7], 4
      %s247 = int_to_ptr.vmem [resolvable:$true] %s246
      %249 = dma.vmem_to_hbm [thread:$0]  %s247, 32, %s4, [#allocation4]
    $region29: #{tpu_custom_call.1} parent=1 // pred_fallthru
      _
    // Predicated region
    $region30: #{tpu_custom_call.1} parent=1 // pred_check
      _
    $region31: #{tpu_custom_call.1} parent=1 // pred_check_branch
      %251 = sbr.rel (0) target = $region33
    $region32: #{tpu_custom_call.1} parent=1 // pred_region
      %252 = dma.done [#allocation4], 32
    $region33: #{tpu_custom_call.1} parent=1 // pred_fallthru
      _
    %253 = vsyncpa [#allocation3], 1
    %254 = vsyncpa [#allocation6], 1
    %255 = vsyncpa [#allocation4], 1

</llo_original>
